<compile_context>
chip_gen: v5e
topology: v5e:2x2
jax: 0.10.0
libtpu: 0.0.40
codegen_flags: <defaults>
</compile_context>

<pallas_src>
import jax
import jax.numpy as jnp
from jax.experimental import pallas as pl
from jax.experimental.pallas import tpu as pltpu


def _round_up(n, m):
    return ((n + m - 1) // m) * m


def _critic_kernel(x_ref, w1_ref, b1_ref, w2_ref, b2_ref, wq_ref, bq_ref, q_ref):
    # fc1 + ReLU (single MXU dot over the already-concatenated input)
    h1 = jnp.dot(x_ref[...], w1_ref[...], preferred_element_type=jnp.float32) + b1_ref[...]
    h1 = jnp.maximum(h1, 0.0)

    # fc2 + ReLU
    h2 = jnp.dot(h1, w2_ref[...], preferred_element_type=jnp.float32) + b2_ref[...]
    h2 = jnp.maximum(h2, 0.0)

    # q head (out_features = 1): VPU multiply + lane reduction, not an N=1 MXU pass.
    q = jnp.sum(h2 * wq_ref[...], axis=-1, keepdims=True) + bq_ref[...]

    # Lane-dense store: fill the whole 128-wide output block; wrapper keeps col 0.
    q_ref[...] = jnp.broadcast_to(q, q_ref.shape).astype(q_ref.dtype)


def prepare_params(params, input_dims):
    """One-time prep: transpose PyTorch (out, in) weights to (in, out), pad the
    hidden dims to multiples of 128 lanes, reshape biases to rows."""
    w1, b1, w2, b2, wq, bq = (params["w1"], params["b1"], params["w2"],
                              params["b2"], params["wq"], params["bq"])
    fc1 = w1.shape[0]
    fc2 = w2.shape[0]
    f1p = _round_up(fc1, 128)
    f2p = _round_up(fc2, 128)

    w1_t = jnp.pad(w1.T, ((0, 0), (0, f1p - fc1)))                    # (Kin, f1p)
    b1_r = jnp.pad(b1.reshape(1, -1), ((0, 0), (0, f1p - fc1)))        # (1, f1p)
    w2_t = jnp.pad(w2.T, ((0, f1p - fc1), (0, f2p - fc2)))             # (f1p, f2p)
    b2_r = jnp.pad(b2.reshape(1, -1), ((0, 0), (0, f2p - fc2)))        # (1, f2p)
    wq_r = jnp.pad(wq.reshape(1, -1), ((0, 0), (0, f2p - fc2)))        # (1, f2p)
    bq_r = bq.reshape(1, 1)                                            # (1, 1)

    return {"w1": w1_t, "b1": b1_r, "w2": w2_t, "b2": b2_r,
            "wq": wq_r, "bq": bq_r}


def critic_forward(state, action, prepped):
    """state: (B, input_dims), action: (B, n_actions * n_agents) -> (B, 1)."""
    w1, b1, w2, b2, wq, bq = (prepped["w1"], prepped["b1"], prepped["w2"],
                              prepped["b2"], prepped["wq"], prepped["bq"])

    b = state.shape[0]
    kin = state.shape[1] + action.shape[1]
    f1p = w1.shape[1]
    f2p = w2.shape[1]

    # Fuse the torch.cat into a single input operand (one dot, one DMA stream).
    x = jnp.concatenate([state.astype(jnp.float32), action.astype(jnp.float32)], axis=1)

    # Batch tiling: TB rows per grid step (multiple of 8), batch padded to TB.
    tb = min(256, _round_up(b, 8))
    b_pad = _round_up(b, tb)
    if b_pad != b:
        x = jnp.pad(x, ((0, b_pad - b), (0, 0)))
    n_blocks = b_pad // tb

    resident = lambda a: pl.BlockSpec(a.shape, lambda i: (0, 0))  # stays in VMEM

    cost = pl.CostEstimate(
        flops=2 * b_pad * (kin * f1p + f1p * f2p + f2p),
        transcendentals=0,
        bytes_accessed=4 * (b_pad * kin + b_pad * 128
                            + kin * f1p + f1p + f1p * f2p + 2 * f2p + 1),
    )

    out = pl.pallas_call(
        _critic_kernel,
        out_shape=jax.ShapeDtypeStruct((b_pad, 128), jnp.float32),
        grid=(n_blocks,),
        in_specs=[
            pl.BlockSpec((tb, kin), lambda i: (i, 0)),   # x tile, pipelined over batch
            resident(w1), resident(b1),
            resident(w2), resident(b2),
            resident(wq), resident(bq),
        ],
        out_specs=pl.BlockSpec((tb, 128), lambda i: (i, 0)),
        compiler_params=pltpu.CompilerParams(dimension_semantics=("parallel",)),
        cost_estimate=cost,
    )(x, w1, b1, w2, b2, wq, bq)

    return out[:b, :1]


critic_forward_jit = jax.jit(critic_forward)


def init_params(key, input_dims, fc1_dims, fc2_dims, n_agents, n_actions):
    """Deterministic synthetic init matching the nn.Linear shapes (out, in)."""
    in1 = input_dims + n_actions * n_agents
    ks = jax.random.split(key, 6)

    def lin(kw, kb, fan_in, fan_out):
        bound = 1.0 / jnp.sqrt(fan_in)
        w = jax.random.uniform(kw, (fan_out, fan_in), jnp.float32, -bound, bound)
        b = jax.random.uniform(kb, (fan_out,), jnp.float32, -bound, bound)
        return w, b

    w1, b1 = lin(ks[0], ks[1], in1, fc1_dims)
    w2, b2 = lin(ks[2], ks[3], fc1_dims, fc2_dims)
    wq, bq = lin(ks[4], ks[5], fc2_dims, 1)
    return {"w1": w1, "b1": b1, "w2": w2, "b2": b2, "wq": wq, "bq": bq}


def _reference(state, action, p):
    x = jnp.concatenate([state, action], axis=1)
    x = jnp.maximum(x @ p["w1"].T + p["b1"], 0.0)
    x = jnp.maximum(x @ p["w2"].T + p["b2"], 0.0)
    return x @ p["wq"].T + p["bq"]


if __name__ == "__main__":
    # Small shapes consistent with the module's forward.
    batch, input_dims, fc1_dims, fc2_dims, n_agents, n_actions = 2, 16, 32, 32, 2, 4

    key = jax.random.PRNGKey(0)
    k_state, k_action, k_params, k_s2, k_a2 = jax.random.split(key, 5)

    state = jax.random.normal(k_state, (batch, input_dims), jnp.float32)
    action = jax.random.normal(k_action, (batch, n_actions * n_agents), jnp.float32)
    params = init_params(k_params, input_dims, fc1_dims, fc2_dims, n_agents, n_actions)
    prepped = prepare_params(params, input_dims)

    # Case 1: tiny batch (single grid step).
    q = jax.block_until_ready(critic_forward_jit(state, action, prepped))
    q_ref = _reference(state, action, params)
    assert q.shape == (batch, 1)
    assert jnp.allclose(q, q_ref, atol=1e-5, rtol=1e-5)

    # Case 2: larger batch exercising the batch grid (multiple steps + padding).
    big_b = 600
    state2 = jax.random.normal(k_s2, (big_b, input_dims), jnp.float32)
    action2 = jax.random.normal(k_a2, (big_b, n_actions * n_agents), jnp.float32)
    q2 = jax.block_until_ready(critic_forward_jit(state2, action2, prepped))
    q2_ref = _reference(state2, action2, params)
    assert q2.shape == (big_b, 1)
    assert jnp.allclose(q2, q2_ref, atol=1e-5, rtol=1e-5)

    print("KERNEL_OK")
</pallas_src>

<mosaic_0001>
module attributes {stable_mosaic.version = 11 : i64} {
  func.func @_critic_kernel(%arg0: i32, %arg1: memref<8x24xf32, #tpu.memory_space<vmem>>, %arg2: memref<24x128xf32, #tpu.memory_space<vmem>>, %arg3: memref<1x128xf32, #tpu.memory_space<vmem>>, %arg4: memref<128x128xf32, #tpu.memory_space<vmem>>, %arg5: memref<1x128xf32, #tpu.memory_space<vmem>>, %arg6: memref<1x128xf32, #tpu.memory_space<vmem>>, %arg7: memref<1x1xf32, #tpu.memory_space<vmem>>, %arg8: memref<8x128xf32, #tpu.memory_space<vmem>>) attributes {dimension_semantics = [#tpu.dimension_semantics<parallel>], iteration_bounds = array<i64: 1>, scalar_prefetch = 0 : i64, scratch_operands = 0 : i64, tpu.core_type = #tpu.core_type<tc>, window_params = [{transform_indices = @transform_0, window_bounds = array<i64: 8, 24>}, {pipeline_mode = #tpu.pipeline_mode<synchronous>, transform_indices = @transform_1, window_bounds = array<i64: 24, 128>}, {pipeline_mode = #tpu.pipeline_mode<synchronous>, transform_indices = @transform_2, window_bounds = array<i64: 1, 128>}, {pipeline_mode = #tpu.pipeline_mode<synchronous>, transform_indices = @transform_3, window_bounds = array<i64: 128, 128>}, {pipeline_mode = #tpu.pipeline_mode<synchronous>, transform_indices = @transform_4, window_bounds = array<i64: 1, 128>}, {pipeline_mode = #tpu.pipeline_mode<synchronous>, transform_indices = @transform_5, window_bounds = array<i64: 1, 128>}, {pipeline_mode = #tpu.pipeline_mode<synchronous>, transform_indices = @transform_6, window_bounds = array<i64: 1, 1>}, {transform_indices = @transform_7, window_bounds = array<i64: 8, 128>}]} {
    %c0 = arith.constant 0 : index
    %c0_0 = arith.constant 0 : index
    %0 = vector.load %arg1[%c0, %c0_0] : memref<8x24xf32, #tpu.memory_space<vmem>>, vector<8x24xf32>
    %c0_1 = arith.constant 0 : index
    %c0_2 = arith.constant 0 : index
    %1 = vector.load %arg2[%c0_1, %c0_2] : memref<24x128xf32, #tpu.memory_space<vmem>>, vector<24x128xf32>
    %cst = arith.constant dense<0.000000e+00> : vector<8x128xf32>
    %2 = tpu.matmul %0, %1, %cst {dimension_numbers = #tpu.dot_dimension_numbers<[1], [0], [0], [1], [0, 0, 1, 1], [], []>} : vector<8x24xf32>, vector<24x128xf32>, vector<8x128xf32> -> vector<8x128xf32>
    %c0_3 = arith.constant 0 : index
    %c0_4 = arith.constant 0 : index
    %3 = vector.load %arg3[%c0_3, %c0_4] : memref<1x128xf32, #tpu.memory_space<vmem>>, vector<1x128xf32>
    %4 = vector.broadcast %3 : vector<1x128xf32> to vector<8x128xf32>
    %5 = arith.addf %2, %4 : vector<8x128xf32>
    %cst_5 = arith.constant 0.000000e+00 : f32
    %6 = vector.broadcast %cst_5 : f32 to vector<8x128xf32>
    %7 = arith.maximumf %5, %6 : vector<8x128xf32>
    %c0_6 = arith.constant 0 : index
    %c0_7 = arith.constant 0 : index
    %8 = vector.load %arg4[%c0_6, %c0_7] : memref<128x128xf32, #tpu.memory_space<vmem>>, vector<128x128xf32>
    %cst_8 = arith.constant dense<0.000000e+00> : vector<8x128xf32>
    %9 = tpu.matmul %7, %8, %cst_8 {dimension_numbers = #tpu.dot_dimension_numbers<[1], [0], [0], [1], [0, 0, 1, 1], [], []>} : vector<8x128xf32>, vector<128x128xf32>, vector<8x128xf32> -> vector<8x128xf32>
    %c0_9 = arith.constant 0 : index
    %c0_10 = arith.constant 0 : index
    %10 = vector.load %arg5[%c0_9, %c0_10] : memref<1x128xf32, #tpu.memory_space<vmem>>, vector<1x128xf32>
    %11 = vector.broadcast %10 : vector<1x128xf32> to vector<8x128xf32>
    %12 = arith.addf %9, %11 : vector<8x128xf32>
    %cst_11 = arith.constant 0.000000e+00 : f32
    %13 = vector.broadcast %cst_11 : f32 to vector<8x128xf32>
    %14 = arith.maximumf %12, %13 : vector<8x128xf32>
    %c0_12 = arith.constant 0 : index
    %c0_13 = arith.constant 0 : index
    %15 = vector.load %arg6[%c0_12, %c0_13] : memref<1x128xf32, #tpu.memory_space<vmem>>, vector<1x128xf32>
    %16 = vector.broadcast %15 : vector<1x128xf32> to vector<8x128xf32>
    %17 = arith.mulf %14, %16 : vector<8x128xf32>
    %cst_14 = arith.constant dense<0.000000e+00> : vector<8xf32>
    %18 = vector.multi_reduction <add>, %17, %cst_14 [1] : vector<8x128xf32> to vector<8xf32>
    %19 = vector.shape_cast %18 : vector<8xf32> to vector<8x1xf32>
    %c0_15 = arith.constant 0 : index
    %c0_16 = arith.constant 0 : index
    %20 = vector.load %arg7[%c0_15, %c0_16] : memref<1x1xf32, #tpu.memory_space<vmem>>, vector<1x1xf32>
    %21 = vector.broadcast %20 : vector<1x1xf32> to vector<8x1xf32>
    %22 = arith.addf %19, %21 : vector<8x1xf32>
    %23 = vector.shape_cast %22 : vector<8x1xf32> to vector<8x1xf32>
    %24 = vector.broadcast %23 : vector<8x1xf32> to vector<8x128xf32>
    %c0_17 = arith.constant 0 : index
    %c0_18 = arith.constant 0 : index
    %25 = vector.load %arg8[%c0_17, %c0_18] : memref<8x128xf32, #tpu.memory_space<vmem>>, vector<8x128xf32>
    tpu.vector_store %arg8[%c0_17, %c0_18], %24 {strides = array<i32>} : memref<8x128xf32, #tpu.memory_space<vmem>>, vector<8x128xf32>,
    return
  }
  func.func @transform_0(%arg0: i32) -> (i32, i32) {
    %c0_i32 = arith.constant 0 : i32
    %c0_i32_0 = arith.constant 0 : i32
    return %arg0, %c0_i32 : i32, i32
  }
  func.func @transform_1(%arg0: i32) -> (i32, i32) {
    %c0_i32 = arith.constant 0 : i32
    %c0_i32_0 = arith.constant 0 : i32
    %c0_i32_1 = arith.constant 0 : i32
    return %c0_i32, %c0_i32_0 : i32, i32
  }
  func.func @transform_2(%arg0: i32) -> (i32, i32) {
    %c0_i32 = arith.constant 0 : i32
    %c0_i32_0 = arith.constant 0 : i32
    %c0_i32_1 = arith.constant 0 : i32
    return %c0_i32, %c0_i32_0 : i32, i32
  }
  func.func @transform_3(%arg0: i32) -> (i32, i32) {
    %c0_i32 = arith.constant 0 : i32
    %c0_i32_0 = arith.constant 0 : i32
    %c0_i32_1 = arith.constant 0 : i32
    return %c0_i32, %c0_i32_0 : i32, i32
  }
  func.func @transform_4(%arg0: i32) -> (i32, i32) {
    %c0_i32 = arith.constant 0 : i32
    %c0_i32_0 = arith.constant 0 : i32
    %c0_i32_1 = arith.constant 0 : i32
    return %c0_i32, %c0_i32_0 : i32, i32
  }
  func.func @transform_5(%arg0: i32) -> (i32, i32) {
    %c0_i32 = arith.constant 0 : i32
    %c0_i32_0 = arith.constant 0 : i32
    %c0_i32_1 = arith.constant 0 : i32
    return %c0_i32, %c0_i32_0 : i32, i32
  }
  func.func @transform_6(%arg0: i32) -> (i32, i32) {
    %c0_i32 = arith.constant 0 : i32
    %c0_i32_0 = arith.constant 0 : i32
    %c0_i32_1 = arith.constant 0 : i32
    return %c0_i32, %c0_i32_0 : i32, i32
  }
  func.func @transform_7(%arg0: i32) -> (i32, i32) {
    %c0_i32 = arith.constant 0 : i32
    %c0_i32_0 = arith.constant 0 : i32
    return %arg0, %c0_i32 : i32, i32
  }
}

</mosaic_0001>

<llo_original>
// kernel: critic_forward.1
$region0: #{critic_forward.1}
  #allocation0 [shape = 'u32[]', space=smem, size = 0x4, offset = 0x4, fixed_abs, tag = 'smem constant byte address 0x4 - core index']
  #allocation1 [shape = 'u32[72,128]{1,0:T(1,128)}', space=vmem, size = 0x9000, scoped, tag = 'internal scratch']
  #allocation2 [shape = 'f32[1,1]{1,0:T(1,128)S(1)}', space=vmem, size = 0x200, scoped, tag = 'scoped memory for critic_forward.1']
  %s0 = inlined_call_operand.vmem [shape: f32[8,24], index: 0, kind: input, shape index: {}]
  %s1 = inlined_call_operand.hbm [shape: f32[24,128], index: 1, kind: input, shape index: {}]
  %s2 = inlined_call_operand.vmem [shape: f32[1,128], index: 2, kind: input, shape index: {}]
  %s3 = inlined_call_operand.hbm [shape: f32[128,128], index: 3, kind: input, shape index: {}]
  %s4 = inlined_call_operand.vmem [shape: f32[1,128], index: 4, kind: input, shape index: {}]
  %s5 = inlined_call_operand.vmem [shape: f32[1,128], index: 5, kind: input, shape index: {}]
  %s6 = inlined_call_operand.<no memory space> [shape: f32[1,1], index: 6, kind: input, shape index: {}]
  %s7 = inlined_call_operand.vmem [shape: f32[8,128], index: 7, kind: output, shape index: {}]
  %s8 = sld [smem:[#allocation0]]
  $region46: #{critic_forward.1} parent=0
    _
  %s10 = ssub.s32 1, %s8
  %s11 = scalar_select 0, %s10, %s8
  %v12 = vstv %s6
  %13 = vst [vmem:[#allocation2] sm:$0x1] %v12
  $region1: #{critic_forward.1} parent=0
    #allocation3 [shape = 'u8[12288]{0}', space=vmem, size = 0x3000, scoped, tag = 'input window, operand 1, single buffered']
    #allocation4 [shape = 's32[1]{0}', space=sflag, size = 0x4, scoped, tag = 'scoped memory for critic_forward.1']
    #allocation5 [shape = 'u8[65536]{0}', space=vmem, size = 0x10000, scoped, tag = 'input window, operand 3, single buffered']
    #allocation6 [shape = 's32[1]{0}', space=sflag, size = 0x4, scoped, tag = 'scoped memory for critic_forward.1']
    %14 = vsyncpa [#allocation4], 0
    %15 = vsyncpa [#allocation6], 0
    // Predicated region
    $region2: #{critic_forward.1} parent=1 // pred_check
      _
    $region3: #{critic_forward.1} parent=1 // pred_check_branch
      %17 = sbr.rel (0) target = $region5
    $region4: #{critic_forward.1} parent=1 // pred_region
      _
    $region5: #{critic_forward.1} parent=1 // pred_fallthru
      _
    // Predicated region
    $region6: #{critic_forward.1} parent=1 // pred_check
      _
    $region7: #{critic_forward.1} parent=1 // pred_check_branch
      %19 = sbr.rel (0) target = $region9
    $region8: #{critic_forward.1} parent=1 // pred_region
      %21 = vsyncadd [#allocation4], 0
      %s22 = sshll.u32 %s1, 4
      %s23 = int_to_ptr.hbm [resolvable:$true] %s22
      %s24 = sshll.u32 [#allocation3], 4
      %s25 = int_to_ptr.vmem [resolvable:$true] %s24
      %30 = dma.hbm_to_vmem [thread:$0]  %s23, 384, %s25, [#allocation4], 128, 128, 8
    $region9: #{critic_forward.1} parent=1 // pred_fallthru
      _
    // Predicated region
    $region10: #{critic_forward.1} parent=1 // pred_check
      _
    $region11: #{critic_forward.1} parent=1 // pred_check_branch
      %32 = sbr.rel (0) target = $region13
    $region12: #{critic_forward.1} parent=1 // pred_region
      _
    $region13: #{critic_forward.1} parent=1 // pred_fallthru
      _
    // Predicated region
    $region14: #{critic_forward.1} parent=1 // pred_check
      _
    $region15: #{critic_forward.1} parent=1 // pred_check_branch
      %34 = sbr.rel (0) target = $region17
    $region16: #{critic_forward.1} parent=1 // pred_region
      %36 = vsyncadd [#allocation6], 0
      %s37 = sshll.u32 %s3, 4
      %s38 = int_to_ptr.hbm [resolvable:$true] %s37
      %s39 = sshll.u32 [#allocation5], 4
      %s40 = int_to_ptr.vmem [resolvable:$true] %s39
      %45 = dma.hbm_to_vmem [thread:$0]  %s38, 2048, %s40, [#allocation6], 128, 128, 8
    $region17: #{critic_forward.1} parent=1 // pred_fallthru
      _
    // Predicated region
    $region18: #{critic_forward.1} parent=1 // pred_check
      _
    $region19: #{critic_forward.1} parent=1 // pred_check_branch
      %47 = sbr.rel (0) target = $region21
    $region20: #{critic_forward.1} parent=1 // pred_region
      _
    $region21: #{critic_forward.1} parent=1 // pred_fallthru
      _
    // Predicated region
    $region22: #{critic_forward.1} parent=1 // pred_check
      _
    $region23: #{critic_forward.1} parent=1 // pred_check_branch
      %49 = sbr.rel (0) target = $region25
    $region24: #{critic_forward.1} parent=1 // pred_region
      _
    $region25: #{critic_forward.1} parent=1 // pred_fallthru
      _
    // Predicated region
    $region26: #{critic_forward.1} parent=1 // pred_check
      _
    $region27: #{critic_forward.1} parent=1 // pred_check_branch
      %51 = sbr.rel (0) target = $region29
    $region28: #{critic_forward.1} parent=1 // pred_region
      _
    $region29: #{critic_forward.1} parent=1 // pred_fallthru
      _
    // Predicated region
    $region30: #{critic_forward.1} parent=1 // pred_check
      _
    $region31: #{critic_forward.1} parent=1 // pred_check_branch
      %53 = sbr.rel (0) target = $region33
    $region32: #{critic_forward.1} parent=1 // pred_region
      %55 = dma.done [#allocation4], 384
    $region33: #{critic_forward.1} parent=1 // pred_fallthru
      _
    // Predicated region
    $region34: #{critic_forward.1} parent=1 // pred_check
      _
    $region35: #{critic_forward.1} parent=1 // pred_check_branch
      %57 = sbr.rel (0) target = $region37
    $region36: #{critic_forward.1} parent=1 // pred_region
      %59 = dma.done [#allocation6], 2048
    $region37: #{critic_forward.1} parent=1 // pred_fallthru
      _
    %v60 = vld [vmem:[%s0] sm:$0xff]
    %v61 = vld [vmem:[#allocation3] sm:$0xff]
    %v62 = vld [vmem:[#allocation3 + $0x8] sm:$0xff]
    %v63 = vld [vmem:[#allocation3 + $0x10] sm:$0xff]
    %v64 = vld [vmem:[%s2] sm:$0x1]
    %v66 = vperm.slane %v64, 0
    %vm68 = vcmask 195584
    %v70 = vsel %vm68, %v60, 0
    %72 = vmatpush.msra.mxu0 0.0
    %73 = vmatpush.msra.mxu0 0.0
    %74 = vmatpush.msra.mxu0 0.0
    %75 = vmatpush.msra.mxu0 0.0
    %76 = vmatpush.msra.mxu0 0.0
    %77 = vmatpush.msra.mxu0 0.0
    %78 = vmatpush.msra.mxu0 0.0
    %79 = vmatpush.msra.mxu0 0.0
    %80 = vmatpush.msra.mxu0 0.0
    %81 = vmatpush.msra.mxu0 0.0
    %82 = vmatpush.msra.mxu0 0.0
    %83 = vmatpush.msra.mxu0 0.0
    %84 = vmatpush.msra.mxu0 0.0
    %85 = vmatpush.msra.mxu0 %v63
    %86 = vmatpush.msra.mxu0 %v62
    %87 = vmatpush.msra.mxu0 %v61
    %88 = vmatmul.f32.gmra.mxu0 %v70
    %v89 = vpop.f32.mrf.mxu0
    %v90 = vadd.f32 %v66, %v89
    %91 = vdwg.mxu0
    %v92 = vmax.f32 %v90, 0.0
    %v93 = vld [vmem:[#allocation5] sm:$0xff]
    %v94 = vld [vmem:[#allocation5 + $0x8] sm:$0xff]
    %v95 = vld [vmem:[#allocation5 + $0x10] sm:$0xff]
    %v96 = vld [vmem:[#allocation5 + $0x18] sm:$0xff]
    %v97 = vld [vmem:[#allocation5 + $0x20] sm:$0xff]
    %v98 = vld [vmem:[#allocation5 + $0x28] sm:$0xff]
    %v99 = vld [vmem:[#allocation5 + $0x30] sm:$0xff]
    %v100 = vld [vmem:[#allocation5 + $0x38] sm:$0xff]
    %v101 = vld [vmem:[#allocation5 + $0x40] sm:$0xff]
    %v102 = vld [vmem:[#allocation5 + $0x48] sm:$0xff]
    %v103 = vld [vmem:[#allocation5 + $0x50] sm:$0xff]
    %v104 = vld [vmem:[#allocation5 + $0x58] sm:$0xff]
    %v105 = vld [vmem:[#allocation5 + $0x60] sm:$0xff]
    %v106 = vld [vmem:[#allocation5 + $0x68] sm:$0xff]
    %v107 = vld [vmem:[#allocation5 + $0x70] sm:$0xff]
    %v108 = vld [vmem:[#allocation5 + $0x78] sm:$0xff]
    %v109 = vld [vmem:[%s4] sm:$0x1]
    %v111 = vperm.slane %v109, 0
    %113 = vmatpush.msra.mxu0 %v108
    %114 = vmatpush.msra.mxu0 %v107
    %115 = vmatpush.msra.mxu0 %v106
    %116 = vmatpush.msra.mxu0 %v105
    %117 = vmatpush.msra.mxu0 %v104
    %118 = vmatpush.msra.mxu0 %v103
    %119 = vmatpush.msra.mxu0 %v102
    %120 = vmatpush.msra.mxu0 %v101
    %121 = vmatpush.msra.mxu0 %v100
    %122 = vmatpush.msra.mxu0 %v99
    %123 = vmatpush.msra.mxu0 %v98
    %124 = vmatpush.msra.mxu0 %v97
    %125 = vmatpush.msra.mxu0 %v96
    %126 = vmatpush.msra.mxu0 %v95
    %127 = vmatpush.msra.mxu0 %v94
    %128 = vmatpush.msra.mxu0 %v93
    %129 = vmatmul.f32.gmra.mxu0 %v92
    %v130 = vpop.f32.mrf.mxu0
    %v131 = vadd.f32 %v111, %v130
    %132 = vdwg.mxu0
    %v133 = vmax.f32 %v131, 0.0
    %v134 = vld [vmem:[%s5] sm:$0x1]
    %v136 = vperm.slane %v134, 0
    %v138 = vmul.f32 %v133, %v136
    %139 = vadd.xlane.f32.xlu0 %v138
    %v140 = vpop.xlane.xlu0 %139
    %v141 = vld [vmem:[#allocation2] sm:$0x1]
    %v143 = vperm.slane %v141, 0
    %v145 = vadd.f32 %v140, %v143
    %147 = vset.pattern.permute.xlu0 0
    %148 = vperm.xlu0 %147, %v145
    %v149 = vpop.permute.xlu0 %148
    %151 = vst [vmem:[%s7] sm:$0xff] %v149
    // Predicated region
    $region38: #{critic_forward.1} parent=1 // pred_check
      _
    $region39: #{critic_forward.1} parent=1 // pred_check_branch
      %153 = sbr.rel (0) target = $region41
    $region40: #{critic_forward.1} parent=1 // pred_region
      _
    $region41: #{critic_forward.1} parent=1 // pred_fallthru
      _
    // Predicated region
    $region42: #{critic_forward.1} parent=1 // pred_check
      _
    $region43: #{critic_forward.1} parent=1 // pred_check_branch
      %155 = sbr.rel (0) target = $region45
    $region44: #{critic_forward.1} parent=1 // pred_region
      _
    $region45: #{critic_forward.1} parent=1 // pred_fallthru
      _
    %156 = vsyncpa [#allocation4], 1
    %157 = vsyncpa [#allocation6], 1

</llo_original>
